<compile_context>
chip_gen: v7x
topology: tpu7x:2x2x1
jax: 0.10.0
libtpu: 0.0.40
codegen_flags: <defaults>
</compile_context>

<pallas_src>
import jax
import jax.numpy as jnp
import numpy as np
from jax.experimental import pallas as pl
from jax.experimental.pallas import tpu as pltpu

# ----- small, deterministic config consistent with the module ----------------
VOCAB = 100          # embedding_indexer vocab size
EMB_DIM = 32         # embedding_indexer.emb_dim
SEQ = 16             # padded sequence length (must be >= max kernel size)
BATCH = 2
CHANNEL = 8          # `channel` arg
KERNEL_SIZES = (2, 3, 4)
FEAT_NUM = 4         # `feat_num` arg
DROPOUT_P = 0.5      # `dropout` arg (identity here; eval mode)

KMAX = max(KERNEL_SIZES)
NC = len(KERNEL_SIZES) * CHANNEL   # 3C = concat width
F_PAD = 128                        # lane-dense padded FC output width


def textcnn_kernel(x_ref, wcat_ref, ball_ref, mask_ref, wfc_ref, bfc_ref,
                   out_ref):
    """Fused in-kernel im2col + single-dot conv (all branches) + bias + ReLU
    + constant-masked time-max-pool + concat + Linear, per batch tile."""
    tb, s_pad, e = x_ref.shape
    s, nc = mask_ref.shape
    kmax = s_pad - s + 1

    # In-kernel im2col: row (b, t) of the slab is x[b, t:t+KMAX, :] flattened,
    # i.e. KMAX shifted [TB, S, E] windows concatenated along lanes -> K=128.
    x = x_ref[...]                                          # [TB, S+KMAX-1, E] bf16
    im2col = jnp.concatenate([x[:, j:j + s, :] for j in range(kmax)], axis=2)
    im2col = im2col.reshape(tb * s, kmax * e)               # [TB*S, KMAX*E]

    # All conv branches in one MXU pass (bf16 operands, f32 accumulation).
    acc = jnp.dot(im2col, wcat_ref[...],
                  preferred_element_type=jnp.float32)       # [TB*S, 3C]

    # conv bias + ReLU, then zero the invalid tail time steps of the shorter
    # branches with a trace-time constant mask.  Zeroing never changes the max
    # since post-ReLU values are >= 0 and every branch's valid range is
    # non-empty (requires SEQ >= max(KERNEL_SIZES)).
    y = jnp.maximum(acc + ball_ref[...], 0.0).reshape(tb, s, nc)
    feat = jnp.max(y * mask_ref[...], axis=1)               # max_pool1d -> [TB, 3C]

    # TODO(synk): F.dropout (stochastic, training-mode) treated as identity.
    out_ref[...] = bfc_ref[...] + jnp.dot(feat.astype(jnp.bfloat16),
                                          wfc_ref[...],
                                          preferred_element_type=jnp.float32)


def _pick_tb(b):
    """Batch tile: whole batch for small B (single grid step); otherwise a
    multiple of 8/16 so TB*S fills the MXU M dim and the output store is
    sublane-dense."""
    for tb in (64, 32, 16, 8):
        if b % tb == 0:
            return tb
    return b


def textcnn_forward(token_ids, params):
    # Embedding lookup (gather) stays in plain JAX (glue around the kernel).
    x = params["emb"][token_ids].astype(jnp.bfloat16)       # [B, S, E]
    B, S, E = x.shape
    TB = _pick_tb(B)
    grid = (B // TB,)

    # Pad time with KMAX-1 zero rows so every shifted window stays in range.
    x_pad = jnp.pad(x, ((0, 0), (0, KMAX - 1), (0, 0)))

    # Fused conv weights as one K = KMAX*E slab:
    # wcat[j*E:(j+1)*E, i*C:(i+1)*C] = W_ki[j*E:(j+1)*E, :], zero for j >= k.
    w_all = jnp.zeros((KMAX, E, NC), jnp.float32)
    for i, k in enumerate(KERNEL_SIZES):
        wk = params[f"w{k}"].reshape(k, E, CHANNEL)
        w_all = w_all.at[:k, :, i * CHANNEL:(i + 1) * CHANNEL].set(wk)
    w_cat = w_all.reshape(KMAX * E, NC).astype(jnp.bfloat16)
    b_all = jnp.concatenate([params[f"b{k}"] for k in KERNEL_SIZES], axis=1)

    # Trace-time validity mask: position t is valid for branch k iff
    # t < S - k + 1.  Tiny resident constant, no in-kernel iota/mod/compare.
    mask_np = np.zeros((S, NC), np.float32)
    for i, k in enumerate(KERNEL_SIZES):
        mask_np[:S - k + 1, i * CHANNEL:(i + 1) * CHANNEL] = 1.0
    mask = jnp.asarray(mask_np)

    # FC weight/bias padded to a lane-dense 128-wide slab.
    wfc_pad = (jnp.zeros((NC, F_PAD), jnp.float32)
               .at[:, :FEAT_NUM].set(params["wfc"]).astype(jnp.bfloat16))
    bfc_pad = jnp.zeros((1, F_PAD), jnp.float32).at[:, :FEAT_NUM].set(params["bfc"])

    out = pl.pallas_call(
        textcnn_kernel,
        out_shape=jax.ShapeDtypeStruct((B, F_PAD), jnp.float32),
        grid_spec=pltpu.PrefetchScalarGridSpec(
            num_scalar_prefetch=0,
            grid=grid,
            in_specs=[
                pl.BlockSpec((TB, S + KMAX - 1, E), lambda b: (b, 0, 0)),
                pl.BlockSpec((KMAX * E, NC), lambda b: (0, 0)),
                pl.BlockSpec((1, NC), lambda b: (0, 0)),
                pl.BlockSpec((S, NC), lambda b: (0, 0)),
                pl.BlockSpec((NC, F_PAD), lambda b: (0, 0)),
                pl.BlockSpec((1, F_PAD), lambda b: (0, 0)),
            ],
            out_specs=pl.BlockSpec((TB, F_PAD), lambda b: (b, 0)),
        ),
        compiler_params=pltpu.CompilerParams(
            dimension_semantics=(("parallel",) if grid[0] > 1
                                 else ("arbitrary",))),
    )(x_pad, w_cat, b_all, mask, wfc_pad, bfc_pad)
    return out[:, :FEAT_NUM]


# ----- pure-JAX reference (mirrors the PyTorch forward, dropout=identity) ----
def unfold(x, k):
    """im2col: [B, S, E] -> [B, S-k+1, k*E]."""
    B, S, E = x.shape
    T = S - k + 1
    return jnp.stack([x[:, t:t + k, :].reshape(B, k * E) for t in range(T)],
                     axis=1)


def reference_forward(token_ids, params):
    x = params["emb"][token_ids]                            # [B, S, E] f32
    feats = []
    for k in KERNEL_SIZES:
        w, b = params[f"w{k}"], params[f"b{k}"]
        xu = unfold(x, k)                                   # [B, T, k*E]
        y = jnp.einsum("btk,kc->btc", xu, w) + b            # conv + bias
        y = jnp.maximum(y, 0.0)                             # ReLU
        feats.append(jnp.max(y, axis=1))                    # max over time
    cat = jnp.concatenate(feats, axis=-1)                   # [B, 3C]
    return cat @ params["wfc"] + params["bfc"]              # Linear


def init_params(key):
    ks = jax.random.split(key, 9)
    p = {"emb": 0.1 * jax.random.normal(ks[0], (VOCAB, EMB_DIM), jnp.float32)}
    # Conv2d(1, C, [k, E]) weights stored flattened as [k*E, C]; bias as [1, C].
    for i, k in enumerate(KERNEL_SIZES):
        p[f"w{k}"] = 0.05 * jax.random.normal(ks[1 + 2 * i],
                                              (k * EMB_DIM, CHANNEL), jnp.float32)
        p[f"b{k}"] = 0.05 * jax.random.normal(ks[2 + 2 * i],
                                              (1, CHANNEL), jnp.float32)
    # Linear(len(ks)*C, feat_num) stored as [3C, F] (already transposed) + [1, F].
    p["wfc"] = 0.05 * jax.random.normal(ks[7],
                                        (len(KERNEL_SIZES) * CHANNEL, FEAT_NUM),
                                        jnp.float32)
    p["bfc"] = 0.05 * jax.random.normal(ks[8], (1, FEAT_NUM), jnp.float32)
    return p


if __name__ == "__main__":
    root = jax.random.PRNGKey(0)
    k_params, k_tok = jax.random.split(root)
    params = init_params(k_params)
    token_ids = jax.random.randint(k_tok, (BATCH, SEQ), 0, VOCAB, dtype=jnp.int32)

    out = textcnn_forward(token_ids, params)
    out = jax.block_until_ready(out)

    ref = reference_forward(token_ids, params)
    assert out.shape == (BATCH, FEAT_NUM), out.shape
    # bf16 matmul operands vs f32 reference -> modest tolerance.
    assert jnp.allclose(out, ref, atol=5e-3, rtol=5e-2), (out, ref)
    print("KERNEL_OK")
</pallas_src>

<mosaic_0001>
module attributes {stable_mosaic.version = 11 : i64} {
  func.func @textcnn_kernel(%arg0: i32, %arg1: memref<2x19x32xbf16, #tpu.memory_space<vmem>>, %arg2: memref<128x24xbf16, #tpu.memory_space<vmem>>, %arg3: memref<1x24xf32, #tpu.memory_space<vmem>>, %arg4: memref<16x24xf32, #tpu.memory_space<vmem>>, %arg5: memref<24x128xbf16, #tpu.memory_space<vmem>>, %arg6: memref<1x128xf32, #tpu.memory_space<vmem>>, %arg7: memref<2x128xf32, #tpu.memory_space<vmem>>) attributes {dimension_semantics = [#tpu.dimension_semantics<arbitrary>], iteration_bounds = array<i64: 1>, scalar_prefetch = 0 : i64, scratch_operands = 0 : i64, tpu.core_type = #tpu.core_type<tc>, window_params = [{transform_indices = @transform_0, window_bounds = array<i64: 2, 19, 32>}, {pipeline_mode = #tpu.pipeline_mode<synchronous>, transform_indices = @transform_1, window_bounds = array<i64: 128, 24>}, {pipeline_mode = #tpu.pipeline_mode<synchronous>, transform_indices = @transform_2, window_bounds = array<i64: 1, 24>}, {pipeline_mode = #tpu.pipeline_mode<synchronous>, transform_indices = @transform_3, window_bounds = array<i64: 16, 24>}, {pipeline_mode = #tpu.pipeline_mode<synchronous>, transform_indices = @transform_4, window_bounds = array<i64: 24, 128>}, {pipeline_mode = #tpu.pipeline_mode<synchronous>, transform_indices = @transform_5, window_bounds = array<i64: 1, 128>}, {transform_indices = @transform_6, window_bounds = array<i64: 2, 128>}]} {
    %c0 = arith.constant 0 : index
    %c0_0 = arith.constant 0 : index
    %c0_1 = arith.constant 0 : index
    %0 = vector.load %arg1[%c0, %c0_0, %c0_1] : memref<2x19x32xbf16, #tpu.memory_space<vmem>>, vector<2x19x32xbf16>
    %1 = vector.extract_strided_slice %0 {offsets = [0, 0, 0], sizes = [2, 16, 32], strides = [1, 1, 1]} : vector<2x19x32xbf16> to vector<2x16x32xbf16>
    %2 = vector.extract_strided_slice %0 {offsets = [0, 1, 0], sizes = [2, 16, 32], strides = [1, 1, 1]} : vector<2x19x32xbf16> to vector<2x16x32xbf16>
    %3 = vector.extract_strided_slice %0 {offsets = [0, 2, 0], sizes = [2, 16, 32], strides = [1, 1, 1]} : vector<2x19x32xbf16> to vector<2x16x32xbf16>
    %4 = vector.extract_strided_slice %0 {offsets = [0, 3, 0], sizes = [2, 16, 32], strides = [1, 1, 1]} : vector<2x19x32xbf16> to vector<2x16x32xbf16>
    %5 = tpu.concatenate %1, %2, %3, %4 in 2 : vector<2x16x32xbf16>, vector<2x16x32xbf16>, vector<2x16x32xbf16>, vector<2x16x32xbf16> -> vector<2x16x128xbf16>
    %6 = vector.shape_cast %5 : vector<2x16x128xbf16> to vector<32x128xbf16>
    %c0_2 = arith.constant 0 : index
    %c0_3 = arith.constant 0 : index
    %7 = vector.load %arg2[%c0_2, %c0_3] : memref<128x24xbf16, #tpu.memory_space<vmem>>, vector<128x24xbf16>
    %cst = arith.constant dense<0.000000e+00> : vector<32x24xf32>
    %8 = tpu.matmul %6, %7, %cst {dimension_numbers = #tpu.dot_dimension_numbers<[1], [0], [0], [1], [0, 0, 1, 1], [], []>} : vector<32x128xbf16>, vector<128x24xbf16>, vector<32x24xf32> -> vector<32x24xf32>
    %c0_4 = arith.constant 0 : index
    %c0_5 = arith.constant 0 : index
    %9 = vector.load %arg3[%c0_4, %c0_5] : memref<1x24xf32, #tpu.memory_space<vmem>>, vector<1x24xf32>
    %10 = vector.broadcast %9 : vector<1x24xf32> to vector<32x24xf32>
    %11 = arith.addf %8, %10 : vector<32x24xf32>
    %cst_6 = arith.constant 0.000000e+00 : f32
    %12 = vector.broadcast %cst_6 : f32 to vector<32x24xf32>
    %13 = arith.maximumf %11, %12 : vector<32x24xf32>
    %14 = vector.shape_cast %13 : vector<32x24xf32> to vector<2x16x24xf32>
    %c0_7 = arith.constant 0 : index
    %c0_8 = arith.constant 0 : index
    %15 = vector.load %arg4[%c0_7, %c0_8] : memref<16x24xf32, #tpu.memory_space<vmem>>, vector<16x24xf32>
    %16 = vector.shape_cast %15 : vector<16x24xf32> to vector<1x16x24xf32>
    %17 = vector.broadcast %16 : vector<1x16x24xf32> to vector<2x16x24xf32>
    %18 = arith.mulf %14, %17 : vector<2x16x24xf32>
    %cst_9 = arith.constant dense<0xFF800000> : vector<2x24xf32>
    %19 = vector.multi_reduction <maximumf>, %18, %cst_9 [1] : vector<2x16x24xf32> to vector<2x24xf32>
    %c0_10 = arith.constant 0 : index
    %c0_11 = arith.constant 0 : index
    %20 = vector.load %arg6[%c0_10, %c0_11] : memref<1x128xf32, #tpu.memory_space<vmem>>, vector<1x128xf32>
    %21 = arith.truncf %19 : vector<2x24xf32> to vector<2x24xbf16>
    %c0_12 = arith.constant 0 : index
    %c0_13 = arith.constant 0 : index
    %22 = vector.load %arg5[%c0_12, %c0_13] : memref<24x128xbf16, #tpu.memory_space<vmem>>, vector<24x128xbf16>
    %cst_14 = arith.constant dense<0.000000e+00> : vector<2x128xf32>
    %23 = tpu.matmul %21, %22, %cst_14 {dimension_numbers = #tpu.dot_dimension_numbers<[1], [0], [0], [1], [0, 0, 1, 1], [], []>} : vector<2x24xbf16>, vector<24x128xbf16>, vector<2x128xf32> -> vector<2x128xf32>
    %24 = vector.broadcast %20 : vector<1x128xf32> to vector<2x128xf32>
    %25 = arith.addf %24, %23 : vector<2x128xf32>
    %c0_15 = arith.constant 0 : index
    %c0_16 = arith.constant 0 : index
    %26 = vector.load %arg7[%c0_15, %c0_16] : memref<2x128xf32, #tpu.memory_space<vmem>>, vector<2x128xf32>
    tpu.vector_store %arg7[%c0_15, %c0_16], %25 {strides = array<i32>} : memref<2x128xf32, #tpu.memory_space<vmem>>, vector<2x128xf32>,
    return
  }
  func.func @transform_0(%arg0: i32) -> (i32, i32, i32) {
    %c0_i32 = arith.constant 0 : i32
    %c0_i32_0 = arith.constant 0 : i32
    %c0_i32_1 = arith.constant 0 : i32
    return %arg0, %c0_i32, %c0_i32_0 : i32, i32, i32
  }
  func.func @transform_1(%arg0: i32) -> (i32, i32) {
    %c0_i32 = arith.constant 0 : i32
    %c0_i32_0 = arith.constant 0 : i32
    %c0_i32_1 = arith.constant 0 : i32
    return %c0_i32, %c0_i32_0 : i32, i32
  }
  func.func @transform_2(%arg0: i32) -> (i32, i32) {
    %c0_i32 = arith.constant 0 : i32
    %c0_i32_0 = arith.constant 0 : i32
    %c0_i32_1 = arith.constant 0 : i32
    return %c0_i32, %c0_i32_0 : i32, i32
  }
  func.func @transform_3(%arg0: i32) -> (i32, i32) {
    %c0_i32 = arith.constant 0 : i32
    %c0_i32_0 = arith.constant 0 : i32
    %c0_i32_1 = arith.constant 0 : i32
    return %c0_i32, %c0_i32_0 : i32, i32
  }
  func.func @transform_4(%arg0: i32) -> (i32, i32) {
    %c0_i32 = arith.constant 0 : i32
    %c0_i32_0 = arith.constant 0 : i32
    %c0_i32_1 = arith.constant 0 : i32
    return %c0_i32, %c0_i32_0 : i32, i32
  }
  func.func @transform_5(%arg0: i32) -> (i32, i32) {
    %c0_i32 = arith.constant 0 : i32
    %c0_i32_0 = arith.constant 0 : i32
    %c0_i32_1 = arith.constant 0 : i32
    return %c0_i32, %c0_i32_0 : i32, i32
  }
  func.func @transform_6(%arg0: i32) -> (i32, i32) {
    %c0_i32 = arith.constant 0 : i32
    %c0_i32_0 = arith.constant 0 : i32
    return %arg0, %c0_i32 : i32, i32
  }
}

</mosaic_0001>

<llo_original>
// kernel: tpu_custom_call.1
$region0: #{tpu_custom_call.1}
  #allocation0 [shape = 'u32[]', space=smem, size = 0x4, offset = 0x4, fixed_abs, tag = 'smem constant byte address 0x4 - core index']
  #allocation1 [shape = 'u32[144,128]{1,0:T(1,128)}', space=vmem, size = 0x12000, scoped, tag = 'internal scratch']
  %s0 = inlined_call_operand.vmem [shape: bf16[2,19,32], index: 0, kind: input, shape index: {}]
  %s1 = inlined_call_operand.vmem [shape: bf16[128,24], index: 1, kind: input, shape index: {}]
  %s2 = inlined_call_operand.vmem [shape: f32[1,24], index: 2, kind: input, shape index: {}]
  %s3 = inlined_call_operand.vmem [shape: f32[16,24], index: 3, kind: input, shape index: {}]
  %s4 = inlined_call_operand.vmem [shape: bf16[24,128], index: 4, kind: input, shape index: {}]
  %s5 = inlined_call_operand.vmem [shape: f32[1,128], index: 5, kind: input, shape index: {}]
  %s6 = inlined_call_operand.hbm [shape: f32[2,128], index: 6, kind: output, shape index: {}]
  %s7 = sld [smem:[#allocation0]]
  $region34: #{tpu_custom_call.1} parent=0
    _
  %s9 = ssub.s32 1, %s7
  %s10 = scalar_select 0, %s9, %s7
  $region1: #{tpu_custom_call.1} parent=0
    #allocation2 [shape = 'u8[1024]{0}', space=vmem, size = 0x400, scoped, tag = 'output window, operand 0, single buffered']
    #allocation3 [shape = 's32[1]{0}', space=sflag, size = 0x4, scoped, tag = 'scoped memory for tpu_custom_call.1']
    %11 = vsyncpa [#allocation3], 0
    // Predicated region
    $region2: #{tpu_custom_call.1} parent=1 // pred_check
      _
    $region3: #{tpu_custom_call.1} parent=1 // pred_check_branch
      %13 = sbr.rel (0) target = $region5
    $region4: #{tpu_custom_call.1} parent=1 // pred_region
      _
    $region5: #{tpu_custom_call.1} parent=1 // pred_fallthru
      _
    // Predicated region
    $region6: #{tpu_custom_call.1} parent=1 // pred_check
      _
    $region7: #{tpu_custom_call.1} parent=1 // pred_check_branch
      %15 = sbr.rel (0) target = $region9
    $region8: #{tpu_custom_call.1} parent=1 // pred_region
      _
    $region9: #{tpu_custom_call.1} parent=1 // pred_fallthru
      _
    // Predicated region
    $region10: #{tpu_custom_call.1} parent=1 // pred_check
      _
    $region11: #{tpu_custom_call.1} parent=1 // pred_check_branch
      %17 = sbr.rel (0) target = $region13
    $region12: #{tpu_custom_call.1} parent=1 // pred_region
      _
    $region13: #{tpu_custom_call.1} parent=1 // pred_fallthru
      _
    // Predicated region
    $region14: #{tpu_custom_call.1} parent=1 // pred_check
      _
    $region15: #{tpu_custom_call.1} parent=1 // pred_check_branch
      %19 = sbr.rel (0) target = $region17
    $region16: #{tpu_custom_call.1} parent=1 // pred_region
      _
    $region17: #{tpu_custom_call.1} parent=1 // pred_fallthru
      _
    // Predicated region
    $region18: #{tpu_custom_call.1} parent=1 // pred_check
      _
    $region19: #{tpu_custom_call.1} parent=1 // pred_check_branch
      %21 = sbr.rel (0) target = $region21
    $region20: #{tpu_custom_call.1} parent=1 // pred_region
      _
    $region21: #{tpu_custom_call.1} parent=1 // pred_fallthru
      _
    // Predicated region
    $region22: #{tpu_custom_call.1} parent=1 // pred_check
      _
    $region23: #{tpu_custom_call.1} parent=1 // pred_check_branch
      %23 = sbr.rel (0) target = $region25
    $region24: #{tpu_custom_call.1} parent=1 // pred_region
      _
    $region25: #{tpu_custom_call.1} parent=1 // pred_fallthru
      _
    %v25 = vld [vmem:[%s0] sm:$0xf]
    %v26 = vld [vmem:[%s0 + $0x4] sm:$0xf]
    %v27 = vld [vmem:[%s0 + $0x8] sm:$0x3]
    %v28 = vld [vmem:[%s0 + $0xc] sm:$0xf]
    %v29 = vld [vmem:[%s0 + $0x10] sm:$0xf]
    %v30 = vld [vmem:[%s0 + $0x14] sm:$0x3]
    %v35 = vunpack.c.l.b16 %v25
    %v36 = vunpack.c.l.b16 %v26
    %v37 = vunpack.c.l.b16 %v28
    %v38 = vunpack.c.l.b16 %v29
    %v39 = vpack.c.b16 %v36, %v35
    %v40 = vpack.c.b16 %v38, %v37
    %v43 = vunpack.c.l.b16 %v27
    %v44 = vunpack.c.l.b16 %v30
    %v45 = vpack.c.b16 %v43, %v43
    %v46 = vpack.c.b16 %v44, %v44
    %vm47 = vsmask.f32 7424
    %v49 = vshrl.u32 %v39, 16
    %v51 = vshll.u32 %v39, 16
    %v53 = vrot.slane %v51, 1
    %v54 = vor.u32 %v49, %v53
    %v56 = vshll.u32 %v45, 16
    %v58 = vrot.slane %v56, 1
    %v59 = vsel %vm47, %v54, %v58
    %v61 = vshrl.u32 %v40, 16
    %v63 = vshll.u32 %v40, 16
    %v65 = vrot.slane %v63, 1
    %v66 = vor.u32 %v61, %v65
    %v68 = vshll.u32 %v46, 16
    %v70 = vrot.slane %v68, 1
    %v71 = vsel %vm47, %v66, %v70
    %72 = vrot.lane.b32.xlu0 %v59, 32
    %v73 = vpop.permute.xlu0 %72
    %74 = vrot.lane.b32.xlu0 %v71, 32
    %v75 = vpop.permute.xlu0 %74
    %vm76 = vcmask 1046528
    %v77 = vrot.slane %v39, 1
    %v78 = vrot.slane %v45, 1
    %v79 = vsel %vm76, %v77, %v78
    %v80 = vrot.slane %v40, 1
    %v81 = vrot.slane %v46, 1
    %v82 = vsel %vm76, %v80, %v81
    %83 = vrot.lane.b32.xlu0 %v79, 64
    %v84 = vpop.permute.xlu0 %83
    %85 = vrot.lane.b32.xlu0 %v82, 64
    %v86 = vpop.permute.xlu0 %85
    %vm87 = vsmask.f32 6400
    %v88 = vrot.slane %v49, 1
    %v89 = vrot.slane %v51, 2
    %v90 = vor.u32 %v88, %v89
    %v91 = vshrl.u32 %v45, 16
    %v93 = vrot.slane %v91, 1
    %v94 = vrot.slane %v56, 2
    %v95 = vor.u32 %v93, %v94
    %v96 = vsel %vm87, %v90, %v95
    %v97 = vrot.slane %v61, 1
    %v98 = vrot.slane %v63, 2
    %v99 = vor.u32 %v97, %v98
    %v100 = vshrl.u32 %v46, 16
    %v102 = vrot.slane %v100, 1
    %v103 = vrot.slane %v68, 2
    %v104 = vor.u32 %v102, %v103
    %v105 = vsel %vm87, %v99, %v104
    %106 = vrot.lane.b32.xlu0 %v96, 96
    %v107 = vpop.permute.xlu0 %106
    %108 = vrot.lane.b32.xlu0 %v105, 96
    %v109 = vpop.permute.xlu0 %108
    %vm110 = vcmask 261120
    %v112 = vsel %vm110, %v39, %v73
    %v114 = vsel %vm110, %v40, %v75
    %vm115 = vcmask 523264
    %v117 = vsel %vm115, %v112, %v84
    %v119 = vsel %vm115, %v114, %v86
    %vm120 = vcmask 785408
    %v122 = vsel %vm120, %v117, %v107
    %v125 = vsel %vm120, %v119, %v109
    %v127 = vld [vmem:[%s1] sm:$0xf]
    %v128 = vld [vmem:[%s1 + $0x4] sm:$0xf]
    %v129 = vld [vmem:[%s1 + $0x8] sm:$0xf]
    %v130 = vld [vmem:[%s1 + $0xc] sm:$0xf]
    %v131 = vld [vmem:[%s1 + $0x10] sm:$0xf]
    %v132 = vld [vmem:[%s1 + $0x14] sm:$0xf]
    %v133 = vld [vmem:[%s1 + $0x18] sm:$0xf]
    %v134 = vld [vmem:[%s1 + $0x1c] sm:$0xf]
    %v135 = vld [vmem:[%s1 + $0x20] sm:$0xf]
    %v136 = vld [vmem:[%s1 + $0x24] sm:$0xf]
    %v137 = vld [vmem:[%s1 + $0x28] sm:$0xf]
    %v138 = vld [vmem:[%s1 + $0x2c] sm:$0xf]
    %v139 = vld [vmem:[%s1 + $0x30] sm:$0xf]
    %v140 = vld [vmem:[%s1 + $0x34] sm:$0xf]
    %v141 = vld [vmem:[%s1 + $0x38] sm:$0xf]
    %v142 = vld [vmem:[%s1 + $0x3c] sm:$0xf]
    %v143 = vld [vmem:[%s2] sm:$0x1]
    %v145 = vlaneseq
    %v146 = vshrl.u32 %v145, 7
    %v147 = vsub.s32 0, %v146
    %v148 = vrot.slane %v143, %v147
    %v166 = vunpack.c.l.b16 %v127
    %v167 = vunpack.c.l.b16 %v128
    %v168 = vunpack.c.l.b16 %v129
    %v169 = vunpack.c.l.b16 %v130
    %v170 = vunpack.c.l.b16 %v131
    %v171 = vunpack.c.l.b16 %v132
    %v172 = vunpack.c.l.b16 %v133
    %v173 = vunpack.c.l.b16 %v134
    %v174 = vunpack.c.l.b16 %v135
    %v175 = vunpack.c.l.b16 %v136
    %v176 = vunpack.c.l.b16 %v137
    %v177 = vunpack.c.l.b16 %v138
    %v178 = vunpack.c.l.b16 %v139
    %v179 = vunpack.c.l.b16 %v140
    %v180 = vunpack.c.l.b16 %v141
    %v181 = vunpack.c.l.b16 %v142
    %v182 = vpack.c.b16 %v167, %v166
    %v183 = vpack.c.b16 %v169, %v168
    %v184 = vpack.c.b16 %v171, %v170
    %v185 = vpack.c.b16 %v173, %v172
    %v186 = vpack.c.b16 %v175, %v174
    %v187 = vpack.c.b16 %v177, %v176
    %v188 = vpack.c.b16 %v179, %v178
    %v189 = vpack.c.b16 %v181, %v180
    %198 = vmatprep.subr.bf16.mxu0 0
    %199 = vmatpush1.bf16.msra.mxu0 %v182
    %200 = vmatprep.subr.bf16.mxu0 0
    %201 = vmatpush1.bf16.msra.mxu0 %v183
    %202 = vmatprep.subr.bf16.mxu0 0
    %203 = vmatpush1.bf16.msra.mxu0 %v184
    %204 = vmatprep.subr.bf16.mxu0 0
    %205 = vmatpush1.bf16.msra.mxu0 %v185
    %206 = vmatprep.subr.bf16.mxu0 0
    %207 = vmatpush1.bf16.msra.mxu0 %v186
    %208 = vmatprep.subr.bf16.mxu0 0
    %209 = vmatpush1.bf16.msra.mxu0 %v187
    %210 = vmatprep.subr.bf16.mxu0 0
    %211 = vmatpush1.bf16.msra.mxu0 %v188
    %212 = vmatprep.subr.bf16.mxu0 0
    %213 = vmatpush1.bf16.msra.mxu0 %v189
    %214 = vmatprep.subr.bf16.mxu0 0
    %215 = vmatpush1.bf16.msra.mxu0 0
    %216 = vmatprep.subr.bf16.mxu0 0
    %217 = vmatpush1.bf16.msra.mxu0 0
    %218 = vmatprep.subr.bf16.mxu0 0
    %219 = vmatpush1.bf16.msra.mxu0 0
    %220 = vmatprep.subr.bf16.mxu0 0
    %221 = vmatpush1.bf16.msra.mxu0 0
    %222 = vmatprep.subr.bf16.mxu0 0
    %223 = vmatpush1.bf16.msra.mxu0 0
    %224 = vmatprep.subr.bf16.mxu0 0
    %225 = vmatpush1.bf16.msra.mxu0 0
    %226 = vmatprep.subr.bf16.mxu0 0
    %227 = vmatpush1.bf16.msra.mxu0 0
    %228 = vmatprep.subr.bf16.mxu0 0
    %229 = vmatpush1.bf16.msra.mxu0 0
    %230 = vmatprep.mubr.bf16.mxu0 0
    %231 = vmatmul.mubr.bf16.gmra.mrb[0].mxu0 %v122
    %v232 = vpop.f32.mrb[0].mxu0
    %v233 = vadd.f32 %v148, %v232
    %v234 = vpop.f32.mrb[0].mxu0
    %v235 = vpop.f32.mrb[0].mxu0
    %v236 = vadd.f32 %v148, %v235
    %v237 = vpop.f32.mrb[0].mxu0
    %238 = vmatprep.mubr.bf16.mxu0 0
    %239 = vmatmul.mubr.bf16.gmra.mrb[0].mxu0 %v125
    %v240 = vpop.f32.mrb[0].mxu0
    %v241 = vadd.f32 %v148, %v240
    %v242 = vpop.f32.mrb[0].mxu0
    %v243 = vpop.f32.mrb[0].mxu0
    %v244 = vadd.f32 %v148, %v243
    %v245 = vpop.f32.mrb[0].mxu0
    %246 = vdwg.mxu0
    %v247 = vmax.f32 %v233, 0.0
    %v248 = vmax.f32 %v236, 0.0
    %v249 = vmax.f32 %v241, 0.0
    %v250 = vmax.f32 %v244, 0.0
    %v251 = vld [vmem:[%s3] sm:$0xff]
    %v252 = vld [vmem:[%s3 + $0x8] sm:$0xff]
    %v253 = vmul.f32 %v247, %v251
    %v254 = vmul.f32 %v248, %v252
    %v255 = vmul.f32 %v249, %v251
    %v256 = vmul.f32 %v250, %v252
    %vm257 = vcmask 195584
    %v258 = vsel %vm257, %v253, -inf
    %v259 = vsel %vm257, %v254, -inf
    %v260 = vmax.f32 %v258, %v259
    %v261 = vrot.slane %v260, 4
    %v262 = vmax.f32 %v260, %v261
    %v263 = vrot.slane %v262, 2
    %v264 = vmax.f32 %v262, %v263
    %v265 = vrot.slane %v264, 1
    %v266 = vmax.f32 %v264, %v265
    %v267 = vsel %vm257, %v255, -inf
    %v268 = vsel %vm257, %v256, -inf
    %v269 = vmax.f32 %v267, %v268
    %v270 = vrot.slane %v269, 4
    %v271 = vmax.f32 %v269, %v270
    %v272 = vrot.slane %v271, 2
    %v273 = vmax.f32 %v271, %v272
    %v274 = vrot.slane %v273, 1
    %v275 = vmax.f32 %v273, %v274
    %v276 = vld [vmem:[%s5] sm:$0x1]
    %v277 = vpack.c.bf16 %v266, %v266
    %v278 = vpack.c.bf16 %v275, %v275
    %v279 = vld [vmem:[%s4] sm:$0xf]
    %v280 = vld [vmem:[%s4 + $0x4] sm:$0xf]
    %v281 = vld [vmem:[%s4 + $0x8] sm:$0xf]
    %v284 = vunpack.c.l.b16 %v277
    %v285 = vunpack.c.l.b16 %v278
    %vm286 = vcmask 1041409
    %v287 = vsel %vm286, %v285, %v284
    %v288 = vpack.c.b16 %v287, %v287
    %v292 = vunpack.c.l.b16 %v279
    %v293 = vunpack.c.l.b16 %v280
    %v294 = vunpack.c.l.b16 %v281
    %v295 = vpack.c.b16 %v293, %v292
    %v296 = vpack.c.b16 %v294, %v294
    %v299 = vsel %vm257, %v288, 0
    %vm301 = vcmask 1043456
    %v303 = vsel %vm301, %v296, 0
    %305 = vmatprep.subr.bf16.mxu0 0
    %306 = vmatpush1.bf16.msra.mxu0 %v295
    %307 = vmatprep.subr.bf16.mxu0 0
    %308 = vmatpush1.bf16.msra.mxu0 %v303
    %309 = vmatprep.subr.bf16.mxu0 0
    %310 = vmatpush1.bf16.msra.mxu0 0
    %311 = vmatprep.subr.bf16.mxu0 0
    %312 = vmatpush1.bf16.msra.mxu0 0
    %313 = vmatprep.subr.bf16.mxu0 0
    %314 = vmatpush1.bf16.msra.mxu0 0
    %315 = vmatprep.subr.bf16.mxu0 0
    %316 = vmatpush1.bf16.msra.mxu0 0
    %317 = vmatprep.subr.bf16.mxu0 0
    %318 = vmatpush1.bf16.msra.mxu0 0
    %319 = vmatprep.subr.bf16.mxu0 0
    %320 = vmatpush1.bf16.msra.mxu0 0
    %321 = vmatprep.subr.bf16.mxu0 0
    %322 = vmatpush1.bf16.msra.mxu0 0
    %323 = vmatprep.subr.bf16.mxu0 0
    %324 = vmatpush1.bf16.msra.mxu0 0
    %325 = vmatprep.subr.bf16.mxu0 0
    %326 = vmatpush1.bf16.msra.mxu0 0
    %327 = vmatprep.subr.bf16.mxu0 0
    %328 = vmatpush1.bf16.msra.mxu0 0
    %329 = vmatprep.subr.bf16.mxu0 0
    %330 = vmatpush1.bf16.msra.mxu0 0
    %331 = vmatprep.subr.bf16.mxu0 0
    %332 = vmatpush1.bf16.msra.mxu0 0
    %333 = vmatprep.subr.bf16.mxu0 0
    %334 = vmatpush1.bf16.msra.mxu0 0
    %335 = vmatprep.subr.bf16.mxu0 0
    %336 = vmatpush1.bf16.msra.mxu0 0
    %337 = vmatprep.mubr.bf16.mxu0 0
    %338 = vmatmul.mubr.bf16.gmra.mrb[0].mxu0 %v299
    %v339 = vpop.f32.mrb[0].mxu0
    %v340 = vadd.f32 0.0, %v339
    %v341 = vpop.f32.mrb[0].mxu0
    %v342 = vpop.f32.mrb[0].mxu0
    %v343 = vpop.f32.mrb[0].mxu0
    %344 = vdwg.mxu0
    %v346 = vlaneseq
    %v347 = vshrl.u32 %v346, 7
    %v348 = vsub.s32 0, %v347
    %v349 = vrot.slane %v276, %v348
    %v351 = vadd.f32 %v349, %v340
    %352 = vst [vmem:[#allocation2] sm:$0x3] %v351
    // Predicated region
    $region26: #{tpu_custom_call.1} parent=1 // pred_check
      _
    $region27: #{tpu_custom_call.1} parent=1 // pred_check_branch
      %354 = sbr.rel (0) target = $region29
    $region28: #{tpu_custom_call.1} parent=1 // pred_region
      %s356 = ssub.s32 32, 32
      %357 = vsyncadd [#allocation3], %s356
      %s359 = sshll.u32 [#allocation2], 4
      %s360 = int_to_ptr.vmem [resolvable:$true] %s359
      %362 = dma.vmem_to_hbm [thread:$0]  %s360, 32, %s6, [#allocation3]
    $region29: #{tpu_custom_call.1} parent=1 // pred_fallthru
      _
    // Predicated region
    $region30: #{tpu_custom_call.1} parent=1 // pred_check
      _
    $region31: #{tpu_custom_call.1} parent=1 // pred_check_branch
      %364 = sbr.rel (0) target = $region33
    $region32: #{tpu_custom_call.1} parent=1 // pred_region
      %365 = dma.done [#allocation3], 32
    $region33: #{tpu_custom_call.1} parent=1 // pred_fallthru
      _
    %366 = vsyncpa [#allocation3], 1

</llo_original>
